<compile_context>
chip_gen: v7x
topology: tpu7x:2x2x1
jax: 0.10.0
libtpu: 0.0.40
codegen_flags: <defaults>
</compile_context>

<pallas_src>
import jax
import jax.numpy as jnp
from jax.experimental import pallas as pl
from jax.experimental.pallas import tpu as pltpu


def _make_convT1x1_clamp_kernel(cin, cout, min_val, max_val):
    def kernel(x_ref, w_ref, b_ref, o_ref):
        # x_ref: (N, Cin, HW)   VMEM  (lane-dense, HW = H*W)
        # w_ref: (Cin*Cout,)    SMEM  w_ref[ci*Cout + co] == weight[ci, co, 0, 0]
        # b_ref: (Cout,)        SMEM
        # o_ref: (N, Cout, HW)  VMEM  (full slab; crop happens in the wrapper)
        # One aligned, lane-dense load per input channel.
        xs = [x_ref[:, ci, :] for ci in range(cin)]  # each (N, HW)

        # out[co] = sum_ci w[ci, co] * x[ci] + b[co]   (pure VPU broadcast-FMA,
        # bias folded into the first term of the chain)
        for co in range(cout):
            acc = xs[0] * w_ref[co] + b_ref[co]
            for ci in range(1, cin):
                acc = acc + xs[ci] * w_ref[ci * cout + co]
            o_ref[:, co, :] = jnp.clip(acc, min_val, max_val)

    return kernel


def conv_transpose_1x1_clamp(x_nchw, weight, bias, min_value, max_value):
    """x_nchw: (N, Cin, H, W) f32
       weight: (Cin, Cout, 1, 1) f32   (PyTorch ConvTranspose2d layout)
       bias:   (Cout,) f32
       returns (N, Cout, H-2, W-2) f32  (NCHW, same as the PyTorch module)
    """
    N, Cin, H, W = x_nchw.shape
    Cout = weight.shape[1]
    assert H > 2 and W > 2, "padding=1 crop needs H > 2 and W > 2"
    HW = H * W
    Ho, Wo = H - 2, W - 2  # padding=1 crop on each side for k=1, s=1

    # Free metadata reshape (NCHW is row-major => (N, Cin, H*W) is the same bytes).
    x_flat = x_nchw.reshape(N, Cin, HW).astype(jnp.float32)
    # Only the 24-element weight / 8-element bias are massaged host-side.
    w_flat = weight[:, :, 0, 0].reshape(Cin * Cout).astype(jnp.float32)
    b_flat = bias.reshape(Cout).astype(jnp.float32)

    kernel = _make_convT1x1_clamp_kernel(
        Cin, Cout, float(min_value), float(max_value))

    cost = pl.CostEstimate(
        flops=2 * N * HW * Cin * Cout,
        transcendentals=0,
        bytes_accessed=4 * (N * Cin * HW + N * Cout * HW + Cin * Cout + Cout),
    )

    out_flat = pl.pallas_call(
        kernel,
        out_shape=jax.ShapeDtypeStruct((N, Cout, HW), jnp.float32),
        grid=(1,),  # single step: whole batch in one KB-scale block
        in_specs=[
            pl.BlockSpec((N, Cin, HW), lambda i: (0, 0, 0)),
            pl.BlockSpec(memory_space=pltpu.MemorySpace.SMEM),
            pl.BlockSpec(memory_space=pltpu.MemorySpace.SMEM),
        ],
        out_specs=pl.BlockSpec((N, Cout, HW), lambda i: (0, 0, 0)),
        compiler_params=pltpu.CompilerParams(
            dimension_semantics=("arbitrary",)),
        cost_estimate=cost,
    )(x_flat, w_flat, b_flat)

    # Trivial wrapper-side crop (the ConvTranspose2d padding=1 with k=1, s=1).
    out = out_flat.reshape(N, Cout, H, W)
    return out[:, :, 1:H - 1, 1:W - 1]


if __name__ == "__main__":
    key = jax.random.PRNGKey(0)
    k_x, k_w, k_b = jax.random.split(key, 3)

    N, Cin, H, W, Cout = 2, 3, 16, 16, 8
    x = jax.random.normal(k_x, (N, Cin, H, W), dtype=jnp.float32)

    # Deterministic parameter init (PyTorch-style uniform bound for k=1 convT).
    bound = 1.0 / (Cin ** 0.5)
    weight = jax.random.uniform(k_w, (Cin, Cout, 1, 1), jnp.float32,
                                minval=-bound, maxval=bound)
    bias = jax.random.uniform(k_b, (Cout,), jnp.float32,
                              minval=-bound, maxval=bound)

    min_value = 12        # matches the module's int min
    max_value = 33.0      # matches max_value.item()

    out = conv_transpose_1x1_clamp(x, weight, bias, min_value, max_value)
    out = jax.block_until_ready(out)

    # Pure-JAX reference.
    ref = jnp.einsum("nchw,co->nohw", x[:, :, 1:H - 1, 1:W - 1],
                     weight[:, :, 0, 0]) + bias[None, :, None, None]
    ref = jnp.clip(ref, float(min_value), float(max_value))

    assert out.shape == (N, Cout, H - 2, W - 2), out.shape
    assert jnp.allclose(out, ref, atol=1e-5), float(jnp.max(jnp.abs(out - ref)))

    print("KERNEL_OK")
</pallas_src>

<mosaic_0001>
module attributes {stable_mosaic.version = 11 : i64} {
  func.func @kernel(%arg0: i32, %arg1: memref<2x3x256xf32, #tpu.memory_space<vmem>>, %arg2: memref<24xf32, #tpu.memory_space<smem>>, %arg3: memref<8xf32, #tpu.memory_space<smem>>, %arg4: memref<2x8x256xf32, #tpu.memory_space<vmem>>) attributes {dimension_semantics = [#tpu.dimension_semantics<arbitrary>], iteration_bounds = array<i64: 1>, scalar_prefetch = 0 : i64, scratch_operands = 0 : i64, tpu.core_type = #tpu.core_type<tc>, window_params = [{pipeline_mode = #tpu.pipeline_mode<synchronous>, transform_indices = @transform_0, window_bounds = array<i64: 2, 3, 256>}, {transform_indices = @transform_1, window_bounds = array<i64: 24>}, {transform_indices = @transform_2, window_bounds = array<i64: 8>}, {pipeline_mode = #tpu.pipeline_mode<synchronous>, transform_indices = @transform_3, window_bounds = array<i64: 2, 8, 256>}]} {
    %c0 = arith.constant 0 : index
    %c0_0 = arith.constant 0 : index
    %c0_1 = arith.constant 0 : index
    %0 = vector.load %arg1[%c0, %c0_0, %c0_1] : memref<2x3x256xf32, #tpu.memory_space<vmem>>, vector<2x1x256xf32>
    %1 = vector.shape_cast %0 : vector<2x1x256xf32> to vector<2x256xf32>
    %c0_2 = arith.constant 0 : index
    %c1 = arith.constant 1 : index
    %c0_3 = arith.constant 0 : index
    %2 = vector.load %arg1[%c0_2, %c1, %c0_3] : memref<2x3x256xf32, #tpu.memory_space<vmem>>, vector<2x1x256xf32>
    %3 = vector.shape_cast %2 : vector<2x1x256xf32> to vector<2x256xf32>
    %c0_4 = arith.constant 0 : index
    %c2 = arith.constant 2 : index
    %c0_5 = arith.constant 0 : index
    %4 = vector.load %arg1[%c0_4, %c2, %c0_5] : memref<2x3x256xf32, #tpu.memory_space<vmem>>, vector<2x1x256xf32>
    %5 = vector.shape_cast %4 : vector<2x1x256xf32> to vector<2x256xf32>
    %c0_6 = arith.constant 0 : index
    %6 = memref.load %arg2[%c0_6] : memref<24xf32, #tpu.memory_space<smem>>
    %7 = vector.broadcast %6 : f32 to vector<2x256xf32>
    %8 = arith.mulf %1, %7 : vector<2x256xf32>
    %c0_7 = arith.constant 0 : index
    %9 = memref.load %arg3[%c0_7] : memref<8xf32, #tpu.memory_space<smem>>
    %10 = vector.broadcast %9 : f32 to vector<2x256xf32>
    %11 = arith.addf %8, %10 : vector<2x256xf32>
    %c8 = arith.constant 8 : index
    %12 = memref.load %arg2[%c8] : memref<24xf32, #tpu.memory_space<smem>>
    %13 = vector.broadcast %12 : f32 to vector<2x256xf32>
    %14 = arith.mulf %3, %13 : vector<2x256xf32>
    %15 = arith.addf %11, %14 : vector<2x256xf32>
    %c16 = arith.constant 16 : index
    %16 = memref.load %arg2[%c16] : memref<24xf32, #tpu.memory_space<smem>>
    %17 = vector.broadcast %16 : f32 to vector<2x256xf32>
    %18 = arith.mulf %5, %17 : vector<2x256xf32>
    %19 = arith.addf %15, %18 : vector<2x256xf32>
    %cst = arith.constant 1.200000e+01 : f32
    %cst_8 = arith.constant 3.300000e+01 : f32
    %20 = vector.broadcast %cst : f32 to vector<2x256xf32>
    %21 = arith.maximumf %20, %19 : vector<2x256xf32>
    %22 = vector.broadcast %cst_8 : f32 to vector<2x256xf32>
    %23 = arith.minimumf %22, %21 : vector<2x256xf32>
    %c0_9 = arith.constant 0 : index
    %c0_10 = arith.constant 0 : index
    %c0_11 = arith.constant 0 : index
    %24 = vector.load %arg4[%c0_9, %c0_10, %c0_11] : memref<2x8x256xf32, #tpu.memory_space<vmem>>, vector<2x1x256xf32>
    %25 = vector.shape_cast %24 : vector<2x1x256xf32> to vector<2x256xf32>
    %26 = vector.shape_cast %23 : vector<2x256xf32> to vector<2x1x256xf32>
    tpu.vector_store %arg4[%c0_9, %c0_10, %c0_11], %26 {strides = array<i32>} : memref<2x8x256xf32, #tpu.memory_space<vmem>>, vector<2x1x256xf32>,
    %c1_12 = arith.constant 1 : index
    %27 = memref.load %arg2[%c1_12] : memref<24xf32, #tpu.memory_space<smem>>
    %28 = vector.broadcast %27 : f32 to vector<2x256xf32>
    %29 = arith.mulf %1, %28 : vector<2x256xf32>
    %c1_13 = arith.constant 1 : index
    %30 = memref.load %arg3[%c1_13] : memref<8xf32, #tpu.memory_space<smem>>
    %31 = vector.broadcast %30 : f32 to vector<2x256xf32>
    %32 = arith.addf %29, %31 : vector<2x256xf32>
    %c9 = arith.constant 9 : index
    %33 = memref.load %arg2[%c9] : memref<24xf32, #tpu.memory_space<smem>>
    %34 = vector.broadcast %33 : f32 to vector<2x256xf32>
    %35 = arith.mulf %3, %34 : vector<2x256xf32>
    %36 = arith.addf %32, %35 : vector<2x256xf32>
    %c17 = arith.constant 17 : index
    %37 = memref.load %arg2[%c17] : memref<24xf32, #tpu.memory_space<smem>>
    %38 = vector.broadcast %37 : f32 to vector<2x256xf32>
    %39 = arith.mulf %5, %38 : vector<2x256xf32>
    %40 = arith.addf %36, %39 : vector<2x256xf32>
    %cst_14 = arith.constant 1.200000e+01 : f32
    %cst_15 = arith.constant 3.300000e+01 : f32
    %41 = vector.broadcast %cst_14 : f32 to vector<2x256xf32>
    %42 = arith.maximumf %41, %40 : vector<2x256xf32>
    %43 = vector.broadcast %cst_15 : f32 to vector<2x256xf32>
    %44 = arith.minimumf %43, %42 : vector<2x256xf32>
    %c0_16 = arith.constant 0 : index
    %c1_17 = arith.constant 1 : index
    %c0_18 = arith.constant 0 : index
    %45 = vector.load %arg4[%c0_16, %c1_17, %c0_18] : memref<2x8x256xf32, #tpu.memory_space<vmem>>, vector<2x1x256xf32>
    %46 = vector.shape_cast %45 : vector<2x1x256xf32> to vector<2x256xf32>
    %47 = vector.shape_cast %44 : vector<2x256xf32> to vector<2x1x256xf32>
    tpu.vector_store %arg4[%c0_16, %c1_17, %c0_18], %47 {strides = array<i32>} : memref<2x8x256xf32, #tpu.memory_space<vmem>>, vector<2x1x256xf32>,
    %c2_19 = arith.constant 2 : index
    %48 = memref.load %arg2[%c2_19] : memref<24xf32, #tpu.memory_space<smem>>
    %49 = vector.broadcast %48 : f32 to vector<2x256xf32>
    %50 = arith.mulf %1, %49 : vector<2x256xf32>
    %c2_20 = arith.constant 2 : index
    %51 = memref.load %arg3[%c2_20] : memref<8xf32, #tpu.memory_space<smem>>
    %52 = vector.broadcast %51 : f32 to vector<2x256xf32>
    %53 = arith.addf %50, %52 : vector<2x256xf32>
    %c10 = arith.constant 10 : index
    %54 = memref.load %arg2[%c10] : memref<24xf32, #tpu.memory_space<smem>>
    %55 = vector.broadcast %54 : f32 to vector<2x256xf32>
    %56 = arith.mulf %3, %55 : vector<2x256xf32>
    %57 = arith.addf %53, %56 : vector<2x256xf32>
    %c18 = arith.constant 18 : index
    %58 = memref.load %arg2[%c18] : memref<24xf32, #tpu.memory_space<smem>>
    %59 = vector.broadcast %58 : f32 to vector<2x256xf32>
    %60 = arith.mulf %5, %59 : vector<2x256xf32>
    %61 = arith.addf %57, %60 : vector<2x256xf32>
    %cst_21 = arith.constant 1.200000e+01 : f32
    %cst_22 = arith.constant 3.300000e+01 : f32
    %62 = vector.broadcast %cst_21 : f32 to vector<2x256xf32>
    %63 = arith.maximumf %62, %61 : vector<2x256xf32>
    %64 = vector.broadcast %cst_22 : f32 to vector<2x256xf32>
    %65 = arith.minimumf %64, %63 : vector<2x256xf32>
    %c0_23 = arith.constant 0 : index
    %c2_24 = arith.constant 2 : index
    %c0_25 = arith.constant 0 : index
    %66 = vector.load %arg4[%c0_23, %c2_24, %c0_25] : memref<2x8x256xf32, #tpu.memory_space<vmem>>, vector<2x1x256xf32>
    %67 = vector.shape_cast %66 : vector<2x1x256xf32> to vector<2x256xf32>
    %68 = vector.shape_cast %65 : vector<2x256xf32> to vector<2x1x256xf32>
    tpu.vector_store %arg4[%c0_23, %c2_24, %c0_25], %68 {strides = array<i32>} : memref<2x8x256xf32, #tpu.memory_space<vmem>>, vector<2x1x256xf32>,
    %c3 = arith.constant 3 : index
    %69 = memref.load %arg2[%c3] : memref<24xf32, #tpu.memory_space<smem>>
    %70 = vector.broadcast %69 : f32 to vector<2x256xf32>
    %71 = arith.mulf %1, %70 : vector<2x256xf32>
    %c3_26 = arith.constant 3 : index
    %72 = memref.load %arg3[%c3_26] : memref<8xf32, #tpu.memory_space<smem>>
    %73 = vector.broadcast %72 : f32 to vector<2x256xf32>
    %74 = arith.addf %71, %73 : vector<2x256xf32>
    %c11 = arith.constant 11 : index
    %75 = memref.load %arg2[%c11] : memref<24xf32, #tpu.memory_space<smem>>
    %76 = vector.broadcast %75 : f32 to vector<2x256xf32>
    %77 = arith.mulf %3, %76 : vector<2x256xf32>
    %78 = arith.addf %74, %77 : vector<2x256xf32>
    %c19 = arith.constant 19 : index
    %79 = memref.load %arg2[%c19] : memref<24xf32, #tpu.memory_space<smem>>
    %80 = vector.broadcast %79 : f32 to vector<2x256xf32>
    %81 = arith.mulf %5, %80 : vector<2x256xf32>
    %82 = arith.addf %78, %81 : vector<2x256xf32>
    %cst_27 = arith.constant 1.200000e+01 : f32
    %cst_28 = arith.constant 3.300000e+01 : f32
    %83 = vector.broadcast %cst_27 : f32 to vector<2x256xf32>
    %84 = arith.maximumf %83, %82 : vector<2x256xf32>
    %85 = vector.broadcast %cst_28 : f32 to vector<2x256xf32>
    %86 = arith.minimumf %85, %84 : vector<2x256xf32>
    %c0_29 = arith.constant 0 : index
    %c3_30 = arith.constant 3 : index
    %c0_31 = arith.constant 0 : index
    %87 = vector.load %arg4[%c0_29, %c3_30, %c0_31] : memref<2x8x256xf32, #tpu.memory_space<vmem>>, vector<2x1x256xf32>
    %88 = vector.shape_cast %87 : vector<2x1x256xf32> to vector<2x256xf32>
    %89 = vector.shape_cast %86 : vector<2x256xf32> to vector<2x1x256xf32>
    tpu.vector_store %arg4[%c0_29, %c3_30, %c0_31], %89 {strides = array<i32>} : memref<2x8x256xf32, #tpu.memory_space<vmem>>, vector<2x1x256xf32>,
    %c4 = arith.constant 4 : index
    %90 = memref.load %arg2[%c4] : memref<24xf32, #tpu.memory_space<smem>>
    %91 = vector.broadcast %90 : f32 to vector<2x256xf32>
    %92 = arith.mulf %1, %91 : vector<2x256xf32>
    %c4_32 = arith.constant 4 : index
    %93 = memref.load %arg3[%c4_32] : memref<8xf32, #tpu.memory_space<smem>>
    %94 = vector.broadcast %93 : f32 to vector<2x256xf32>
    %95 = arith.addf %92, %94 : vector<2x256xf32>
    %c12 = arith.constant 12 : index
    %96 = memref.load %arg2[%c12] : memref<24xf32, #tpu.memory_space<smem>>
    %97 = vector.broadcast %96 : f32 to vector<2x256xf32>
    %98 = arith.mulf %3, %97 : vector<2x256xf32>
    %99 = arith.addf %95, %98 : vector<2x256xf32>
    %c20 = arith.constant 20 : index
    %100 = memref.load %arg2[%c20] : memref<24xf32, #tpu.memory_space<smem>>
    %101 = vector.broadcast %100 : f32 to vector<2x256xf32>
    %102 = arith.mulf %5, %101 : vector<2x256xf32>
    %103 = arith.addf %99, %102 : vector<2x256xf32>
    %cst_33 = arith.constant 1.200000e+01 : f32
    %cst_34 = arith.constant 3.300000e+01 : f32
    %104 = vector.broadcast %cst_33 : f32 to vector<2x256xf32>
    %105 = arith.maximumf %104, %103 : vector<2x256xf32>
    %106 = vector.broadcast %cst_34 : f32 to vector<2x256xf32>
    %107 = arith.minimumf %106, %105 : vector<2x256xf32>
    %c0_35 = arith.constant 0 : index
    %c4_36 = arith.constant 4 : index
    %c0_37 = arith.constant 0 : index
    %108 = vector.load %arg4[%c0_35, %c4_36, %c0_37] : memref<2x8x256xf32, #tpu.memory_space<vmem>>, vector<2x1x256xf32>
    %109 = vector.shape_cast %108 : vector<2x1x256xf32> to vector<2x256xf32>
    %110 = vector.shape_cast %107 : vector<2x256xf32> to vector<2x1x256xf32>
    tpu.vector_store %arg4[%c0_35, %c4_36, %c0_37], %110 {strides = array<i32>} : memref<2x8x256xf32, #tpu.memory_space<vmem>>, vector<2x1x256xf32>,
    %c5 = arith.constant 5 : index
    %111 = memref.load %arg2[%c5] : memref<24xf32, #tpu.memory_space<smem>>
    %112 = vector.broadcast %111 : f32 to vector<2x256xf32>
    %113 = arith.mulf %1, %112 : vector<2x256xf32>
    %c5_38 = arith.constant 5 : index
    %114 = memref.load %arg3[%c5_38] : memref<8xf32, #tpu.memory_space<smem>>
    %115 = vector.broadcast %114 : f32 to vector<2x256xf32>
    %116 = arith.addf %113, %115 : vector<2x256xf32>
    %c13 = arith.constant 13 : index
    %117 = memref.load %arg2[%c13] : memref<24xf32, #tpu.memory_space<smem>>
    %118 = vector.broadcast %117 : f32 to vector<2x256xf32>
    %119 = arith.mulf %3, %118 : vector<2x256xf32>
    %120 = arith.addf %116, %119 : vector<2x256xf32>
    %c21 = arith.constant 21 : index
    %121 = memref.load %arg2[%c21] : memref<24xf32, #tpu.memory_space<smem>>
    %122 = vector.broadcast %121 : f32 to vector<2x256xf32>
    %123 = arith.mulf %5, %122 : vector<2x256xf32>
    %124 = arith.addf %120, %123 : vector<2x256xf32>
    %cst_39 = arith.constant 1.200000e+01 : f32
    %cst_40 = arith.constant 3.300000e+01 : f32
    %125 = vector.broadcast %cst_39 : f32 to vector<2x256xf32>
    %126 = arith.maximumf %125, %124 : vector<2x256xf32>
    %127 = vector.broadcast %cst_40 : f32 to vector<2x256xf32>
    %128 = arith.minimumf %127, %126 : vector<2x256xf32>
    %c0_41 = arith.constant 0 : index
    %c5_42 = arith.constant 5 : index
    %c0_43 = arith.constant 0 : index
    %129 = vector.load %arg4[%c0_41, %c5_42, %c0_43] : memref<2x8x256xf32, #tpu.memory_space<vmem>>, vector<2x1x256xf32>
    %130 = vector.shape_cast %129 : vector<2x1x256xf32> to vector<2x256xf32>
    %131 = vector.shape_cast %128 : vector<2x256xf32> to vector<2x1x256xf32>
    tpu.vector_store %arg4[%c0_41, %c5_42, %c0_43], %131 {strides = array<i32>} : memref<2x8x256xf32, #tpu.memory_space<vmem>>, vector<2x1x256xf32>,
    %c6 = arith.constant 6 : index
    %132 = memref.load %arg2[%c6] : memref<24xf32, #tpu.memory_space<smem>>
    %133 = vector.broadcast %132 : f32 to vector<2x256xf32>
    %134 = arith.mulf %1, %133 : vector<2x256xf32>
    %c6_44 = arith.constant 6 : index
    %135 = memref.load %arg3[%c6_44] : memref<8xf32, #tpu.memory_space<smem>>
    %136 = vector.broadcast %135 : f32 to vector<2x256xf32>
    %137 = arith.addf %134, %136 : vector<2x256xf32>
    %c14 = arith.constant 14 : index
    %138 = memref.load %arg2[%c14] : memref<24xf32, #tpu.memory_space<smem>>
    %139 = vector.broadcast %138 : f32 to vector<2x256xf32>
    %140 = arith.mulf %3, %139 : vector<2x256xf32>
    %141 = arith.addf %137, %140 : vector<2x256xf32>
    %c22 = arith.constant 22 : index
    %142 = memref.load %arg2[%c22] : memref<24xf32, #tpu.memory_space<smem>>
    %143 = vector.broadcast %142 : f32 to vector<2x256xf32>
    %144 = arith.mulf %5, %143 : vector<2x256xf32>
    %145 = arith.addf %141, %144 : vector<2x256xf32>
    %cst_45 = arith.constant 1.200000e+01 : f32
    %cst_46 = arith.constant 3.300000e+01 : f32
    %146 = vector.broadcast %cst_45 : f32 to vector<2x256xf32>
    %147 = arith.maximumf %146, %145 : vector<2x256xf32>
    %148 = vector.broadcast %cst_46 : f32 to vector<2x256xf32>
    %149 = arith.minimumf %148, %147 : vector<2x256xf32>
    %c0_47 = arith.constant 0 : index
    %c6_48 = arith.constant 6 : index
    %c0_49 = arith.constant 0 : index
    %150 = vector.load %arg4[%c0_47, %c6_48, %c0_49] : memref<2x8x256xf32, #tpu.memory_space<vmem>>, vector<2x1x256xf32>
    %151 = vector.shape_cast %150 : vector<2x1x256xf32> to vector<2x256xf32>
    %152 = vector.shape_cast %149 : vector<2x256xf32> to vector<2x1x256xf32>
    tpu.vector_store %arg4[%c0_47, %c6_48, %c0_49], %152 {strides = array<i32>} : memref<2x8x256xf32, #tpu.memory_space<vmem>>, vector<2x1x256xf32>,
    %c7 = arith.constant 7 : index
    %153 = memref.load %arg2[%c7] : memref<24xf32, #tpu.memory_space<smem>>
    %154 = vector.broadcast %153 : f32 to vector<2x256xf32>
    %155 = arith.mulf %1, %154 : vector<2x256xf32>
    %c7_50 = arith.constant 7 : index
    %156 = memref.load %arg3[%c7_50] : memref<8xf32, #tpu.memory_space<smem>>
    %157 = vector.broadcast %156 : f32 to vector<2x256xf32>
    %158 = arith.addf %155, %157 : vector<2x256xf32>
    %c15 = arith.constant 15 : index
    %159 = memref.load %arg2[%c15] : memref<24xf32, #tpu.memory_space<smem>>
    %160 = vector.broadcast %159 : f32 to vector<2x256xf32>
    %161 = arith.mulf %3, %160 : vector<2x256xf32>
    %162 = arith.addf %158, %161 : vector<2x256xf32>
    %c23 = arith.constant 23 : index
    %163 = memref.load %arg2[%c23] : memref<24xf32, #tpu.memory_space<smem>>
    %164 = vector.broadcast %163 : f32 to vector<2x256xf32>
    %165 = arith.mulf %5, %164 : vector<2x256xf32>
    %166 = arith.addf %162, %165 : vector<2x256xf32>
    %cst_51 = arith.constant 1.200000e+01 : f32
    %cst_52 = arith.constant 3.300000e+01 : f32
    %167 = vector.broadcast %cst_51 : f32 to vector<2x256xf32>
    %168 = arith.maximumf %167, %166 : vector<2x256xf32>
    %169 = vector.broadcast %cst_52 : f32 to vector<2x256xf32>
    %170 = arith.minimumf %169, %168 : vector<2x256xf32>
    %c0_53 = arith.constant 0 : index
    %c7_54 = arith.constant 7 : index
    %c0_55 = arith.constant 0 : index
    %171 = vector.load %arg4[%c0_53, %c7_54, %c0_55] : memref<2x8x256xf32, #tpu.memory_space<vmem>>, vector<2x1x256xf32>
    %172 = vector.shape_cast %171 : vector<2x1x256xf32> to vector<2x256xf32>
    %173 = vector.shape_cast %170 : vector<2x256xf32> to vector<2x1x256xf32>
    tpu.vector_store %arg4[%c0_53, %c7_54, %c0_55], %173 {strides = array<i32>} : memref<2x8x256xf32, #tpu.memory_space<vmem>>, vector<2x1x256xf32>,
    return
  }
  func.func @transform_0(%arg0: i32) -> (i32, i32, i32) {
    %c0_i32 = arith.constant 0 : i32
    %c0_i32_0 = arith.constant 0 : i32
    %c0_i32_1 = arith.constant 0 : i32
    %c0_i32_2 = arith.constant 0 : i32
    return %c0_i32, %c0_i32_0, %c0_i32_1 : i32, i32, i32
  }
  func.func @transform_1(%arg0: i32) -> i32 {
    %c0_i32 = arith.constant 0 : i32
    %c0_i32_0 = arith.constant 0 : i32
    return %c0_i32 : i32
  }
  func.func @transform_2(%arg0: i32) -> i32 {
    %c0_i32 = arith.constant 0 : i32
    %c0_i32_0 = arith.constant 0 : i32
    return %c0_i32 : i32
  }
  func.func @transform_3(%arg0: i32) -> (i32, i32, i32) {
    %c0_i32 = arith.constant 0 : i32
    %c0_i32_0 = arith.constant 0 : i32
    %c0_i32_1 = arith.constant 0 : i32
    %c0_i32_2 = arith.constant 0 : i32
    return %c0_i32, %c0_i32_0, %c0_i32_1 : i32, i32, i32
  }
}

</mosaic_0001>

<llo_original>
// kernel: tpu_custom_call.1
$region0: #{tpu_custom_call.1}
  #allocation0 [shape = 'u32[]', space=smem, size = 0x4, offset = 0x4, fixed_abs, tag = 'smem constant byte address 0x4 - core index']
  #allocation1 [shape = 'u32[144,128]{1,0:T(1,128)}', space=vmem, size = 0x12000, scoped, tag = 'internal scratch']
  %s0 = inlined_call_operand.vmem [shape: f32[2,3,256], index: 0, kind: input, shape index: {}]
  %s1 = inlined_call_operand.vmem [shape: f32[24], index: 1, kind: input, shape index: {}]
  %s2 = inlined_call_operand.vmem [shape: f32[8], index: 2, kind: input, shape index: {}]
  %s3 = inlined_call_operand.hbm [shape: f32[2,8,256], index: 3, kind: output, shape index: {}]
  %s4 = sld [smem:[#allocation0]]
  $region30: #{tpu_custom_call.1} parent=0
    _
  %s6 = ssub.s32 1, %s4
  %s7 = scalar_select 0, %s6, %s4
  $region1: #{tpu_custom_call.1} parent=0
    #allocation2 [shape = 'u8[512]{0}', space=smem, size = 0x200, scoped, tag = 'input window, operand 1, single buffered']
    #allocation3 [shape = 's32[1]{0}', space=sflag, size = 0x4, scoped, tag = 'scoped memory for tpu_custom_call.1']
    #allocation4 [shape = 's32[1]{0}', space=sflag, size = 0x4, scoped, tag = 'scoped memory for tpu_custom_call.1']
    #allocation5 [shape = 'u8[512]{0}', space=smem, size = 0x200, scoped, tag = 'input window, operand 2, single buffered']
    #allocation6 [shape = 's32[1]{0}', space=sflag, size = 0x4, scoped, tag = 'scoped memory for tpu_custom_call.1']
    #allocation7 [shape = 'u8[16384]{0}', space=vmem, size = 0x4000, scoped, tag = 'output window, operand 0, single buffered']
    %8 = vsyncpa [#allocation4], 0
    %9 = vsyncpa [#allocation6], 0
    %10 = vsyncpa [#allocation3], 0
    // Predicated region
    $region2: #{tpu_custom_call.1} parent=1 // pred_check
      _
    $region3: #{tpu_custom_call.1} parent=1 // pred_check_branch
      %12 = sbr.rel (0) target = $region5
    $region4: #{tpu_custom_call.1} parent=1 // pred_region
      _
    $region5: #{tpu_custom_call.1} parent=1 // pred_fallthru
      _
    // Predicated region
    $region6: #{tpu_custom_call.1} parent=1 // pred_check
      _
    $region7: #{tpu_custom_call.1} parent=1 // pred_check_branch
      %14 = sbr.rel (0) target = $region9
    $region8: #{tpu_custom_call.1} parent=1 // pred_region
      %s16 = ssub.s32 16, 16
      %17 = vsyncadd [#allocation4], %s16
      %s19 = sshll.u32 %s1, 4
      %s20 = int_to_ptr.vmem [resolvable:$true] %s19
      %22 = dma.vmem_to_smem %s20, 16, [#allocation2], [#allocation4]
    $region9: #{tpu_custom_call.1} parent=1 // pred_fallthru
      _
    // Predicated region
    $region10: #{tpu_custom_call.1} parent=1 // pred_check
      _
    $region11: #{tpu_custom_call.1} parent=1 // pred_check_branch
      %24 = sbr.rel (0) target = $region13
    $region12: #{tpu_custom_call.1} parent=1 // pred_region
      %s26 = ssub.s32 16, 16
      %27 = vsyncadd [#allocation6], %s26
      %s29 = sshll.u32 %s2, 4
      %s30 = int_to_ptr.vmem [resolvable:$true] %s29
      %32 = dma.vmem_to_smem %s30, 16, [#allocation5], [#allocation6]
    $region13: #{tpu_custom_call.1} parent=1 // pred_fallthru
      _
    // Predicated region
    $region14: #{tpu_custom_call.1} parent=1 // pred_check
      _
    $region15: #{tpu_custom_call.1} parent=1 // pred_check_branch
      %34 = sbr.rel (0) target = $region17
    $region16: #{tpu_custom_call.1} parent=1 // pred_region
      %35 = dma.done [#allocation4], 16
    $region17: #{tpu_custom_call.1} parent=1 // pred_fallthru
      _
    // Predicated region
    $region18: #{tpu_custom_call.1} parent=1 // pred_check
      _
    $region19: #{tpu_custom_call.1} parent=1 // pred_check_branch
      %37 = sbr.rel (0) target = $region21
    $region20: #{tpu_custom_call.1} parent=1 // pred_region
      %38 = dma.done [#allocation6], 16
    $region21: #{tpu_custom_call.1} parent=1 // pred_fallthru
      _
    %39 = sfence
    %v40 = vld [vmem:[%s0] ss:$4 sm:$0x3]
    %s41 = scalar_lea.vmem %s0, 8
    %v42 = vld [vmem:[%s41] ss:$4 sm:$0x3]
    %s43 = scalar_lea.vmem %s0, 1
    %v44 = vld [vmem:[%s43] ss:$4 sm:$0x3]
    %s45 = scalar_lea.vmem %s0, 9
    %v46 = vld [vmem:[%s45] ss:$4 sm:$0x3]
    %s47 = scalar_lea.vmem %s0, 2
    %v48 = vld [vmem:[%s47] ss:$4 sm:$0x3]
    %s49 = scalar_lea.vmem %s0, 10
    %v50 = vld [vmem:[%s49] ss:$4 sm:$0x3]
    %s51 = sld [smem:[#allocation2]]
    %v52 = vstv %s51
    %v53 = vmul.f32 %v40, %v52
    %v54 = vmul.f32 %v42, %v52
    %s55 = sld [smem:[#allocation5]]
    %v56 = vstv %s55
    %v57 = vadd.f32 %v53, %v56
    %v58 = vadd.f32 %v54, %v56
    %s59 = sld [smem:[#allocation2 + $0x8]]
    %v60 = vstv %s59
    %v61 = vmul.f32 %v44, %v60
    %v62 = vmul.f32 %v46, %v60
    %v63 = vadd.f32 %v57, %v61
    %v64 = vadd.f32 %v58, %v62
    %s65 = sld [smem:[#allocation2 + $0x10]]
    %v66 = vstv %s65
    %v67 = vmul.f32 %v48, %v66
    %v68 = vmul.f32 %v50, %v66
    %v69 = vadd.f32 %v63, %v67
    %v70 = vadd.f32 %v64, %v68
    %v71 = vmax.f32 %v69, 12.0
    %v72 = vmax.f32 %v70, 12.0
    %v73 = vmin.f32 %v71, 33.0
    %v74 = vmin.f32 %v72, 33.0
    %v75 = vlaneseq
    %vm76 = vcmp.ge.s32.totalorder %v75, 0
    %vm77 = vcmp.lt.s32.totalorder %v75, 256
    %vm78 = vmand %vm76, %vm77
    %79 = vst.msk [vmem:[#allocation7] ss:$8 sm:$0x3] %vm78, %v73
    %80 = vst.msk [vmem:[#allocation7] ss:$8 sm:$0x0] %vm78, %v73
    %s81 = scalar_lea.vmem [#allocation7], 16
    %82 = vst.msk [vmem:[%s81] ss:$8 sm:$0x3] %vm78, %v74
    %83 = vst.msk [vmem:[%s81] ss:$8 sm:$0x0] %vm78, %v74
    %s84 = sld [smem:[#allocation2 + $0x1]]
    %v85 = vstv %s84
    %v86 = vmul.f32 %v40, %v85
    %v87 = vmul.f32 %v42, %v85
    %s88 = sld [smem:[#allocation5 + $0x1]]
    %v89 = vstv %s88
    %v90 = vadd.f32 %v86, %v89
    %v91 = vadd.f32 %v87, %v89
    %s92 = sld [smem:[#allocation2 + $0x9]]
    %v93 = vstv %s92
    %v94 = vmul.f32 %v44, %v93
    %v95 = vmul.f32 %v46, %v93
    %v96 = vadd.f32 %v90, %v94
    %v97 = vadd.f32 %v91, %v95
    %s98 = sld [smem:[#allocation2 + $0x11]]
    %v99 = vstv %s98
    %v100 = vmul.f32 %v48, %v99
    %v101 = vmul.f32 %v50, %v99
    %v102 = vadd.f32 %v96, %v100
    %v103 = vadd.f32 %v97, %v101
    %v104 = vmax.f32 %v102, 12.0
    %v105 = vmax.f32 %v103, 12.0
    %v106 = vmin.f32 %v104, 33.0
    %v107 = vmin.f32 %v105, 33.0
    %s108 = scalar_lea.vmem [#allocation7], 1
    %109 = vst.msk [vmem:[%s108] ss:$8 sm:$0x3] %vm78, %v106
    %110 = vst.msk [vmem:[%s108] ss:$8 sm:$0x0] %vm78, %v106
    %s111 = scalar_lea.vmem [#allocation7], 17
    %112 = vst.msk [vmem:[%s111] ss:$8 sm:$0x3] %vm78, %v107
    %113 = vst.msk [vmem:[%s111] ss:$8 sm:$0x0] %vm78, %v107
    %s114 = sld [smem:[#allocation2 + $0x2]]
    %v115 = vstv %s114
    %v116 = vmul.f32 %v40, %v115
    %v117 = vmul.f32 %v42, %v115
    %s118 = sld [smem:[#allocation5 + $0x2]]
    %v119 = vstv %s118
    %v120 = vadd.f32 %v116, %v119
    %v121 = vadd.f32 %v117, %v119
    %s122 = sld [smem:[#allocation2 + $0xa]]
    %v123 = vstv %s122
    %v124 = vmul.f32 %v44, %v123
    %v125 = vmul.f32 %v46, %v123
    %v126 = vadd.f32 %v120, %v124
    %v127 = vadd.f32 %v121, %v125
    %s128 = sld [smem:[#allocation2 + $0x12]]
    %v129 = vstv %s128
    %v130 = vmul.f32 %v48, %v129
    %v131 = vmul.f32 %v50, %v129
    %v132 = vadd.f32 %v126, %v130
    %v133 = vadd.f32 %v127, %v131
    %v134 = vmax.f32 %v132, 12.0
    %v135 = vmax.f32 %v133, 12.0
    %v136 = vmin.f32 %v134, 33.0
    %v137 = vmin.f32 %v135, 33.0
    %s138 = scalar_lea.vmem [#allocation7], 2
    %139 = vst.msk [vmem:[%s138] ss:$8 sm:$0x3] %vm78, %v136
    %140 = vst.msk [vmem:[%s138] ss:$8 sm:$0x0] %vm78, %v136
    %s141 = scalar_lea.vmem [#allocation7], 18
    %142 = vst.msk [vmem:[%s141] ss:$8 sm:$0x3] %vm78, %v137
    %143 = vst.msk [vmem:[%s141] ss:$8 sm:$0x0] %vm78, %v137
    %s144 = sld [smem:[#allocation2 + $0x3]]
    %v145 = vstv %s144
    %v146 = vmul.f32 %v40, %v145
    %v147 = vmul.f32 %v42, %v145
    %s148 = sld [smem:[#allocation5 + $0x3]]
    %v149 = vstv %s148
    %v150 = vadd.f32 %v146, %v149
    %v151 = vadd.f32 %v147, %v149
    %s152 = sld [smem:[#allocation2 + $0xb]]
    %v153 = vstv %s152
    %v154 = vmul.f32 %v44, %v153
    %v155 = vmul.f32 %v46, %v153
    %v156 = vadd.f32 %v150, %v154
    %v157 = vadd.f32 %v151, %v155
    %s158 = sld [smem:[#allocation2 + $0x13]]
    %v159 = vstv %s158
    %v160 = vmul.f32 %v48, %v159
    %v161 = vmul.f32 %v50, %v159
    %v162 = vadd.f32 %v156, %v160
    %v163 = vadd.f32 %v157, %v161
    %v164 = vmax.f32 %v162, 12.0
    %v165 = vmax.f32 %v163, 12.0
    %v166 = vmin.f32 %v164, 33.0
    %v167 = vmin.f32 %v165, 33.0
    %s168 = scalar_lea.vmem [#allocation7], 3
    %169 = vst.msk [vmem:[%s168] ss:$8 sm:$0x3] %vm78, %v166
    %170 = vst.msk [vmem:[%s168] ss:$8 sm:$0x0] %vm78, %v166
    %s171 = scalar_lea.vmem [#allocation7], 19
    %172 = vst.msk [vmem:[%s171] ss:$8 sm:$0x3] %vm78, %v167
    %173 = vst.msk [vmem:[%s171] ss:$8 sm:$0x0] %vm78, %v167
    %s174 = sld [smem:[#allocation2 + $0x4]]
    %v175 = vstv %s174
    %v176 = vmul.f32 %v40, %v175
    %v177 = vmul.f32 %v42, %v175
    %s178 = sld [smem:[#allocation5 + $0x4]]
    %v179 = vstv %s178
    %v180 = vadd.f32 %v176, %v179
    %v181 = vadd.f32 %v177, %v179
    %s182 = sld [smem:[#allocation2 + $0xc]]
    %v183 = vstv %s182
    %v184 = vmul.f32 %v44, %v183
    %v185 = vmul.f32 %v46, %v183
    %v186 = vadd.f32 %v180, %v184
    %v187 = vadd.f32 %v181, %v185
    %s188 = sld [smem:[#allocation2 + $0x14]]
    %v189 = vstv %s188
    %v190 = vmul.f32 %v48, %v189
    %v191 = vmul.f32 %v50, %v189
    %v192 = vadd.f32 %v186, %v190
    %v193 = vadd.f32 %v187, %v191
    %v194 = vmax.f32 %v192, 12.0
    %v195 = vmax.f32 %v193, 12.0
    %v196 = vmin.f32 %v194, 33.0
    %v197 = vmin.f32 %v195, 33.0
    %s198 = scalar_lea.vmem [#allocation7], 4
    %199 = vst.msk [vmem:[%s198] ss:$8 sm:$0x3] %vm78, %v196
    %200 = vst.msk [vmem:[%s198] ss:$8 sm:$0x0] %vm78, %v196
    %s201 = scalar_lea.vmem [#allocation7], 20
    %202 = vst.msk [vmem:[%s201] ss:$8 sm:$0x3] %vm78, %v197
    %203 = vst.msk [vmem:[%s201] ss:$8 sm:$0x0] %vm78, %v197
    %s204 = sld [smem:[#allocation2 + $0x5]]
    %v205 = vstv %s204
    %v206 = vmul.f32 %v40, %v205
    %v207 = vmul.f32 %v42, %v205
    %s208 = sld [smem:[#allocation5 + $0x5]]
    %v209 = vstv %s208
    %v210 = vadd.f32 %v206, %v209
    %v211 = vadd.f32 %v207, %v209
    %s212 = sld [smem:[#allocation2 + $0xd]]
    %v213 = vstv %s212
    %v214 = vmul.f32 %v44, %v213
    %v215 = vmul.f32 %v46, %v213
    %v216 = vadd.f32 %v210, %v214
    %v217 = vadd.f32 %v211, %v215
    %s218 = sld [smem:[#allocation2 + $0x15]]
    %v219 = vstv %s218
    %v220 = vmul.f32 %v48, %v219
    %v221 = vmul.f32 %v50, %v219
    %v222 = vadd.f32 %v216, %v220
    %v223 = vadd.f32 %v217, %v221
    %v224 = vmax.f32 %v222, 12.0
    %v225 = vmax.f32 %v223, 12.0
    %v226 = vmin.f32 %v224, 33.0
    %v227 = vmin.f32 %v225, 33.0
    %s228 = scalar_lea.vmem [#allocation7], 5
    %229 = vst.msk [vmem:[%s228] ss:$8 sm:$0x3] %vm78, %v226
    %230 = vst.msk [vmem:[%s228] ss:$8 sm:$0x0] %vm78, %v226
    %s231 = scalar_lea.vmem [#allocation7], 21
    %232 = vst.msk [vmem:[%s231] ss:$8 sm:$0x3] %vm78, %v227
    %233 = vst.msk [vmem:[%s231] ss:$8 sm:$0x0] %vm78, %v227
    %s234 = sld [smem:[#allocation2 + $0x6]]
    %v235 = vstv %s234
    %v236 = vmul.f32 %v40, %v235
    %v237 = vmul.f32 %v42, %v235
    %s238 = sld [smem:[#allocation5 + $0x6]]
    %v239 = vstv %s238
    %v240 = vadd.f32 %v236, %v239
    %v241 = vadd.f32 %v237, %v239
    %s242 = sld [smem:[#allocation2 + $0xe]]
    %v243 = vstv %s242
    %v244 = vmul.f32 %v44, %v243
    %v245 = vmul.f32 %v46, %v243
    %v246 = vadd.f32 %v240, %v244
    %v247 = vadd.f32 %v241, %v245
    %s248 = sld [smem:[#allocation2 + $0x16]]
    %v249 = vstv %s248
    %v250 = vmul.f32 %v48, %v249
    %v251 = vmul.f32 %v50, %v249
    %v252 = vadd.f32 %v246, %v250
    %v253 = vadd.f32 %v247, %v251
    %v254 = vmax.f32 %v252, 12.0
    %v255 = vmax.f32 %v253, 12.0
    %v256 = vmin.f32 %v254, 33.0
    %v257 = vmin.f32 %v255, 33.0
    %s258 = scalar_lea.vmem [#allocation7], 6
    %259 = vst.msk [vmem:[%s258] ss:$8 sm:$0x3] %vm78, %v256
    %260 = vst.msk [vmem:[%s258] ss:$8 sm:$0x0] %vm78, %v256
    %s261 = scalar_lea.vmem [#allocation7], 22
    %262 = vst.msk [vmem:[%s261] ss:$8 sm:$0x3] %vm78, %v257
    %263 = vst.msk [vmem:[%s261] ss:$8 sm:$0x0] %vm78, %v257
    %s264 = sld [smem:[#allocation2 + $0x7]]
    %v265 = vstv %s264
    %v266 = vmul.f32 %v40, %v265
    %v267 = vmul.f32 %v42, %v265
    %s268 = sld [smem:[#allocation5 + $0x7]]
    %v269 = vstv %s268
    %v270 = vadd.f32 %v266, %v269
    %v271 = vadd.f32 %v267, %v269
    %s272 = sld [smem:[#allocation2 + $0xf]]
    %v273 = vstv %s272
    %v274 = vmul.f32 %v44, %v273
    %v275 = vmul.f32 %v46, %v273
    %v276 = vadd.f32 %v270, %v274
    %v277 = vadd.f32 %v271, %v275
    %s278 = sld [smem:[#allocation2 + $0x17]]
    %v279 = vstv %s278
    %v280 = vmul.f32 %v48, %v279
    %v281 = vmul.f32 %v50, %v279
    %v282 = vadd.f32 %v276, %v280
    %v283 = vadd.f32 %v277, %v281
    %v284 = vmax.f32 %v282, 12.0
    %v285 = vmax.f32 %v283, 12.0
    %v286 = vmin.f32 %v284, 33.0
    %v287 = vmin.f32 %v285, 33.0
    %s288 = scalar_lea.vmem [#allocation7], 7
    %289 = vst.msk [vmem:[%s288] ss:$8 sm:$0x3] %vm78, %v286
    %290 = vst.msk [vmem:[%s288] ss:$8 sm:$0x0] %vm78, %v286
    %s291 = scalar_lea.vmem [#allocation7], 23
    %292 = vst.msk [vmem:[%s291] ss:$8 sm:$0x3] %vm78, %v287
    %293 = vst.msk [vmem:[%s291] ss:$8 sm:$0x0] %vm78, %v287
    // Predicated region
    $region22: #{tpu_custom_call.1} parent=1 // pred_check
      _
    $region23: #{tpu_custom_call.1} parent=1 // pred_check_branch
      %295 = sbr.rel (0) target = $region25
    $region24: #{tpu_custom_call.1} parent=1 // pred_region
      %s297 = ssub.s32 512, 512
      %298 = vsyncadd [#allocation3], %s297
      %s299 = sshll.u32 [#allocation7], 4
      %s300 = int_to_ptr.vmem [resolvable:$true] %s299
      %305 = dma.vmem_to_hbm [thread:$0]  %s300, 512, %s3, [#allocation3], 256, 256, 16
    $region25: #{tpu_custom_call.1} parent=1 // pred_fallthru
      _
    // Predicated region
    $region26: #{tpu_custom_call.1} parent=1 // pred_check
      _
    $region27: #{tpu_custom_call.1} parent=1 // pred_check_branch
      %307 = sbr.rel (0) target = $region29
    $region28: #{tpu_custom_call.1} parent=1 // pred_region
      %308 = dma.done [#allocation3], 512
    $region29: #{tpu_custom_call.1} parent=1 // pred_fallthru
      _
    %309 = vsyncpa [#allocation3], 1
    %310 = vsyncpa [#allocation4], 1
    %311 = vsyncpa [#allocation6], 1

</llo_original>
